<compile_context>
chip_gen: v5e
topology: v5e:2x2
jax: 0.10.0
libtpu: 0.0.40
codegen_flags: <defaults>
</compile_context>

<pallas_src>
import functools

import jax
import jax.numpy as jnp
from jax.experimental import pallas as pl
from jax.experimental.pallas import tpu as pltpu

N = 8          # samples reduced over (torch dim 0, per task)
F = 160        # per-sample feature dim; cat([mean, var]) -> 2F = 320 = fc1 in
H = 128        # fc1 out_features
O = 84         # fc2 out_features = 32*2 + 10*2
OP = 128       # lane-padded fc2 / output width (84 -> 128)
TB = 8         # tasks per grid step (multiple of 8 for sublane alignment)


def _softplus(z):
    # torch.nn.Softplus(beta=1, threshold=20): x for x > 20, else log1p(exp(x))
    return jnp.where(z > 20.0, z, jnp.log1p(jnp.exp(jnp.minimum(z, 20.0))))


def _forward_tile(x_ref, w1_ref, b1_ref, w2_ref, b2_ref, eps_ref_or_none, out_ref):
    x = x_ref[...].astype(jnp.float32)                        # (TB, N, F)
    n = x.shape[1]

    # --- per-task reduction over samples: mean and unbiased variance (f32) ---
    mean = jnp.sum(x, axis=1) * (1.0 / n)                     # (TB, F)
    centered = x - mean[:, None, :]
    var = jnp.sum(centered * centered, axis=1) * (1.0 / (n - 1))  # (TB, F)

    # --- fc1 on cat([mean, var]) without materializing the concat:
    #     feat @ W1 = mean @ W1[:F] + var @ W1[F:]   (ref slices; F=160 is
    #     sublane-aligned so these are free VMEM views feeding the MXU)
    h = (jnp.dot(mean.astype(jnp.bfloat16), w1_ref[:F, :],
                 preferred_element_type=jnp.float32)
         + jnp.dot(var.astype(jnp.bfloat16), w1_ref[F:, :],
                   preferred_element_type=jnp.float32)
         + b1_ref[...])                                       # (TB, H) f32
    h = jnp.maximum(h, 0.0)                                   # ReLU

    # --- fc2 (lane-padded to 128) + softplus ---
    z = jnp.dot(h.astype(jnp.bfloat16), w2_ref[...],
                preferred_element_type=jnp.float32) + b2_ref[...]   # (TB, OP)
    mu = _softplus(z)

    if eps_ref_or_none is not None:
        # meta_train=True: softplus(eps + mu)
        out_ref[...] = _softplus(eps_ref_or_none[...] + mu)
    else:
        # meta_train=False: softplus(mu)  (softplus applied twice, as in torch)
        out_ref[...] = _softplus(mu)


def _kernel_train(x_ref, w1_ref, b1_ref, w2_ref, b2_ref, eps_ref, out_ref):
    _forward_tile(x_ref, w1_ref, b1_ref, w2_ref, b2_ref, eps_ref, out_ref)


def _kernel_eval(x_ref, w1_ref, b1_ref, w2_ref, b2_ref, out_ref):
    _forward_tile(x_ref, w1_ref, b1_ref, w2_ref, b2_ref, None, out_ref)


def prepare_params(w1, b1, w2, b2):
    """One-time parameter prep (hoisted out of the per-call hot path).

    Weights use (in_features, out_features) layout (transpose of torch storage);
    fc2 weight/bias are zero-padded from O=84 to OP=128 lanes.
    """
    w1p = jnp.asarray(w1, jnp.bfloat16)                               # (2F, H)
    b1p = jnp.asarray(b1, jnp.float32).reshape(1, H)                  # (1, H)
    w2p = jnp.zeros((H, OP), jnp.bfloat16).at[:, :O].set(
        jnp.asarray(w2, jnp.bfloat16))                                # (H, OP)
    b2p = jnp.zeros((1, OP), jnp.float32).at[0, :O].set(
        jnp.asarray(b2, jnp.float32))                                 # (1, OP)
    return w1p, b1p, w2p, b2p


@functools.partial(jax.jit, static_argnames=("meta_train", "tb"))
def inference_net_forward(x, prepared_params, eps=None, meta_train=True, tb=TB):
    """Batched forward.

    x:   (B, N, F) — B independent tasks, each reduced over its N samples.
    eps: (B, O) noise (only used when meta_train=True; randn_like(mu) equivalent).
    Returns (B, O) float32.
    """
    w1p, b1p, w2p, b2p = prepared_params
    B = x.shape[0]
    Bp = ((B + tb - 1) // tb) * tb
    x = jnp.asarray(x, jnp.float32)
    if Bp != B:
        x = jnp.pad(x, ((0, Bp - B), (0, 0), (0, 0)))

    const2 = lambda b: (0, 0)
    in_specs = [
        pl.BlockSpec((tb, N, F), lambda b: (b, 0, 0)),   # per-task x block
        pl.BlockSpec((2 * F, H), const2),                # w1: VMEM-resident
        pl.BlockSpec((1, H), const2),                    # b1
        pl.BlockSpec((H, OP), const2),                   # w2 (padded)
        pl.BlockSpec((1, OP), const2),                   # b2 (padded)
    ]
    args = [x, w1p, b1p, w2p, b2p]

    if meta_train:
        if eps is None:
            raise ValueError("meta_train=True requires eps of shape (B, O)")
        eps_p = jnp.zeros((Bp, OP), jnp.float32).at[:B, :O].set(
            jnp.asarray(eps, jnp.float32))
        in_specs.append(pl.BlockSpec((tb, OP), lambda b: (b, 0)))
        args.append(eps_p)
        kernel = _kernel_train
    else:
        kernel = _kernel_eval

    out = pl.pallas_call(
        kernel,
        out_shape=jax.ShapeDtypeStruct((Bp, OP), jnp.float32),
        grid=(Bp // tb,),
        in_specs=in_specs,
        out_specs=pl.BlockSpec((tb, OP), lambda b: (b, 0)),
        compiler_params=pltpu.CompilerParams(
            dimension_semantics=("parallel",)),   # sharded across v7x's 2 TCs
    )(*args)

    return out[:B, :O]


def init_params(key):
    """Deterministic init mirroring torch.nn.Linear default (uniform +-1/sqrt(fan_in))."""
    k1, k2, k3, k4 = jax.random.split(key, 4)
    lim1 = 1.0 / jnp.sqrt(2.0 * F)    # fc1 fan_in = 320
    lim2 = 1.0 / jnp.sqrt(float(H))   # fc2 fan_in = 128
    w1 = jax.random.uniform(k1, (2 * F, H), jnp.float32, -lim1, lim1)
    b1 = jax.random.uniform(k2, (H,), jnp.float32, -lim1, lim1)
    w2 = jax.random.uniform(k3, (H, O), jnp.float32, -lim2, lim2)
    b2 = jax.random.uniform(k4, (O,), jnp.float32, -lim2, lim2)
    return w1, b1, w2, b2


if __name__ == "__main__":
    key = jax.random.PRNGKey(0)
    kx, kp, ke = jax.random.split(key, 3)

    B = 16                                             # batch of tasks
    x = jax.random.normal(kx, (B, N, F), jnp.float32)  # (16, 8, 160)
    prepared = prepare_params(*init_params(kp))
    # TODO(synk): torch.randn_like(mu) is supplied as an explicit eps input
    # (host-side RNG) rather than generated in-kernel.
    eps = jax.random.normal(ke, (B, O), jnp.float32)

    out_train = inference_net_forward(x, prepared, eps=eps, meta_train=True)
    out_eval = inference_net_forward(x, prepared, meta_train=False)

    jax.block_until_ready(out_train)
    jax.block_until_ready(out_eval)

    assert out_train.shape == (B, O) and out_eval.shape == (B, O)
    assert bool(jnp.all(jnp.isfinite(out_train)))
    assert bool(jnp.all(jnp.isfinite(out_eval)))
    assert bool(jnp.all(out_train > 0)) and bool(jnp.all(out_eval > 0))  # softplus > 0
    print("KERNEL_OK")
</pallas_src>

<mosaic_0001>
module attributes {stable_mosaic.version = 11 : i64} {
  func.func @_kernel_train(%arg0: i32, %arg1: memref<8x8x160xf32, #tpu.memory_space<vmem>>, %arg2: memref<320x128xbf16, #tpu.memory_space<vmem>>, %arg3: memref<1x128xf32, #tpu.memory_space<vmem>>, %arg4: memref<128x128xbf16, #tpu.memory_space<vmem>>, %arg5: memref<1x128xf32, #tpu.memory_space<vmem>>, %arg6: memref<8x128xf32, #tpu.memory_space<vmem>>, %arg7: memref<8x128xf32, #tpu.memory_space<vmem>>) attributes {dimension_semantics = [#tpu.dimension_semantics<parallel>], iteration_bounds = array<i64: 2>, scalar_prefetch = 0 : i64, scratch_operands = 0 : i64, tpu.core_type = #tpu.core_type<tc>, window_params = [{transform_indices = @transform_0, window_bounds = array<i64: 8, 8, 160>}, {pipeline_mode = #tpu.pipeline_mode<synchronous>, transform_indices = @transform_1, window_bounds = array<i64: 320, 128>}, {pipeline_mode = #tpu.pipeline_mode<synchronous>, transform_indices = @transform_2, window_bounds = array<i64: 1, 128>}, {pipeline_mode = #tpu.pipeline_mode<synchronous>, transform_indices = @transform_3, window_bounds = array<i64: 128, 128>}, {pipeline_mode = #tpu.pipeline_mode<synchronous>, transform_indices = @transform_4, window_bounds = array<i64: 1, 128>}, {transform_indices = @transform_5, window_bounds = array<i64: 8, 128>}, {transform_indices = @transform_6, window_bounds = array<i64: 8, 128>}]} {
    %c0 = arith.constant 0 : index
    %c0_0 = arith.constant 0 : index
    %c0_1 = arith.constant 0 : index
    %0 = vector.load %arg1[%c0, %c0_0, %c0_1] : memref<8x8x160xf32, #tpu.memory_space<vmem>>, vector<8x8x160xf32>
    %cst = arith.constant dense<0.000000e+00> : vector<8x160xf32>
    %1 = vector.multi_reduction <add>, %0, %cst [1] : vector<8x8x160xf32> to vector<8x160xf32>
    %cst_2 = arith.constant 1.250000e-01 : f32
    %2 = vector.broadcast %cst_2 : f32 to vector<8x160xf32>
    %3 = arith.mulf %1, %2 : vector<8x160xf32>
    %4 = vector.shape_cast %3 : vector<8x160xf32> to vector<8x1x160xf32>
    %5 = vector.broadcast %4 : vector<8x1x160xf32> to vector<8x8x160xf32>
    %6 = arith.subf %0, %5 : vector<8x8x160xf32>
    %7 = arith.mulf %6, %6 : vector<8x8x160xf32>
    %cst_3 = arith.constant dense<0.000000e+00> : vector<8x160xf32>
    %8 = vector.multi_reduction <add>, %7, %cst_3 [1] : vector<8x8x160xf32> to vector<8x160xf32>
    %cst_4 = arith.constant 0.142857149 : f32
    %9 = vector.broadcast %cst_4 : f32 to vector<8x160xf32>
    %10 = arith.mulf %8, %9 : vector<8x160xf32>
    %11 = arith.truncf %3 : vector<8x160xf32> to vector<8x160xbf16>
    %c0_5 = arith.constant 0 : index
    %c0_6 = arith.constant 0 : index
    %12 = vector.load %arg2[%c0_5, %c0_6] : memref<320x128xbf16, #tpu.memory_space<vmem>>, vector<160x128xbf16>
    %cst_7 = arith.constant dense<0.000000e+00> : vector<8x128xf32>
    %13 = tpu.matmul %11, %12, %cst_7 {dimension_numbers = #tpu.dot_dimension_numbers<[1], [0], [0], [1], [0, 0, 1, 1], [], []>} : vector<8x160xbf16>, vector<160x128xbf16>, vector<8x128xf32> -> vector<8x128xf32>
    %14 = arith.truncf %10 : vector<8x160xf32> to vector<8x160xbf16>
    %c160 = arith.constant 160 : index
    %c0_8 = arith.constant 0 : index
    %15 = vector.load %arg2[%c160, %c0_8] : memref<320x128xbf16, #tpu.memory_space<vmem>>, vector<160x128xbf16>
    %cst_9 = arith.constant dense<0.000000e+00> : vector<8x128xf32>
    %16 = tpu.matmul %14, %15, %cst_9 {dimension_numbers = #tpu.dot_dimension_numbers<[1], [0], [0], [1], [0, 0, 1, 1], [], []>} : vector<8x160xbf16>, vector<160x128xbf16>, vector<8x128xf32> -> vector<8x128xf32>
    %17 = arith.addf %13, %16 : vector<8x128xf32>
    %c0_10 = arith.constant 0 : index
    %c0_11 = arith.constant 0 : index
    %18 = vector.load %arg3[%c0_10, %c0_11] : memref<1x128xf32, #tpu.memory_space<vmem>>, vector<1x128xf32>
    %19 = vector.broadcast %18 : vector<1x128xf32> to vector<8x128xf32>
    %20 = arith.addf %17, %19 : vector<8x128xf32>
    %cst_12 = arith.constant 0.000000e+00 : f32
    %21 = vector.broadcast %cst_12 : f32 to vector<8x128xf32>
    %22 = arith.maximumf %20, %21 : vector<8x128xf32>
    %23 = arith.truncf %22 : vector<8x128xf32> to vector<8x128xbf16>
    %c0_13 = arith.constant 0 : index
    %c0_14 = arith.constant 0 : index
    %24 = vector.load %arg4[%c0_13, %c0_14] : memref<128x128xbf16, #tpu.memory_space<vmem>>, vector<128x128xbf16>
    %cst_15 = arith.constant dense<0.000000e+00> : vector<8x128xf32>
    %25 = tpu.matmul %23, %24, %cst_15 {dimension_numbers = #tpu.dot_dimension_numbers<[1], [0], [0], [1], [0, 0, 1, 1], [], []>} : vector<8x128xbf16>, vector<128x128xbf16>, vector<8x128xf32> -> vector<8x128xf32>
    %c0_16 = arith.constant 0 : index
    %c0_17 = arith.constant 0 : index
    %26 = vector.load %arg5[%c0_16, %c0_17] : memref<1x128xf32, #tpu.memory_space<vmem>>, vector<1x128xf32>
    %27 = vector.broadcast %26 : vector<1x128xf32> to vector<8x128xf32>
    %28 = arith.addf %25, %27 : vector<8x128xf32>
    %cst_18 = arith.constant 2.000000e+01 : f32
    %29 = vector.broadcast %cst_18 : f32 to vector<8x128xf32>
    %30 = arith.cmpf ogt, %28, %29 : vector<8x128xf32>
    %cst_19 = arith.constant 2.000000e+01 : f32
    %31 = vector.broadcast %cst_19 : f32 to vector<8x128xf32>
    %32 = arith.minimumf %28, %31 : vector<8x128xf32>
    %33 = math.exp %32 : vector<8x128xf32>
    %34 = math.log1p %33 : vector<8x128xf32>
    %35 = arith.select %30, %28, %34 : vector<8x128xi1>, vector<8x128xf32>
    %c0_20 = arith.constant 0 : index
    %c0_21 = arith.constant 0 : index
    %36 = vector.load %arg6[%c0_20, %c0_21] : memref<8x128xf32, #tpu.memory_space<vmem>>, vector<8x128xf32>
    %37 = arith.addf %36, %35 : vector<8x128xf32>
    %cst_22 = arith.constant 2.000000e+01 : f32
    %38 = vector.broadcast %cst_22 : f32 to vector<8x128xf32>
    %39 = arith.cmpf ogt, %37, %38 : vector<8x128xf32>
    %cst_23 = arith.constant 2.000000e+01 : f32
    %40 = vector.broadcast %cst_23 : f32 to vector<8x128xf32>
    %41 = arith.minimumf %37, %40 : vector<8x128xf32>
    %42 = math.exp %41 : vector<8x128xf32>
    %43 = math.log1p %42 : vector<8x128xf32>
    %44 = arith.select %39, %37, %43 : vector<8x128xi1>, vector<8x128xf32>
    %c0_24 = arith.constant 0 : index
    %c0_25 = arith.constant 0 : index
    %45 = vector.load %arg7[%c0_24, %c0_25] : memref<8x128xf32, #tpu.memory_space<vmem>>, vector<8x128xf32>
    tpu.vector_store %arg7[%c0_24, %c0_25], %44 {strides = array<i32>} : memref<8x128xf32, #tpu.memory_space<vmem>>, vector<8x128xf32>,
    return
  }
  func.func @transform_0(%arg0: i32) -> (i32, i32, i32) {
    %c0_i32 = arith.constant 0 : i32
    %c0_i32_0 = arith.constant 0 : i32
    %c0_i32_1 = arith.constant 0 : i32
    return %arg0, %c0_i32, %c0_i32_0 : i32, i32, i32
  }
  func.func @transform_1(%arg0: i32) -> (i32, i32) {
    %c0_i32 = arith.constant 0 : i32
    %c0_i32_0 = arith.constant 0 : i32
    %c0_i32_1 = arith.constant 0 : i32
    return %c0_i32, %c0_i32_0 : i32, i32
  }
  func.func @transform_2(%arg0: i32) -> (i32, i32) {
    %c0_i32 = arith.constant 0 : i32
    %c0_i32_0 = arith.constant 0 : i32
    %c0_i32_1 = arith.constant 0 : i32
    return %c0_i32, %c0_i32_0 : i32, i32
  }
  func.func @transform_3(%arg0: i32) -> (i32, i32) {
    %c0_i32 = arith.constant 0 : i32
    %c0_i32_0 = arith.constant 0 : i32
    %c0_i32_1 = arith.constant 0 : i32
    return %c0_i32, %c0_i32_0 : i32, i32
  }
  func.func @transform_4(%arg0: i32) -> (i32, i32) {
    %c0_i32 = arith.constant 0 : i32
    %c0_i32_0 = arith.constant 0 : i32
    %c0_i32_1 = arith.constant 0 : i32
    return %c0_i32, %c0_i32_0 : i32, i32
  }
  func.func @transform_5(%arg0: i32) -> (i32, i32) {
    %c0_i32 = arith.constant 0 : i32
    %c0_i32_0 = arith.constant 0 : i32
    return %arg0, %c0_i32 : i32, i32
  }
  func.func @transform_6(%arg0: i32) -> (i32, i32) {
    %c0_i32 = arith.constant 0 : i32
    %c0_i32_0 = arith.constant 0 : i32
    return %arg0, %c0_i32 : i32, i32
  }
}

</mosaic_0001>

<llo_original>
// kernel: inference_net_forward.1
$region0: #{inference_net_forward.1}
  #allocation0 [shape = 'u32[]', space=smem, size = 0x4, offset = 0x4, fixed_abs, tag = 'smem constant byte address 0x4 - core index']
  #allocation1 [shape = 'u32[72,128]{1,0:T(1,128)}', space=vmem, size = 0x9000, scoped, tag = 'internal scratch']
  %s0 = inlined_call_operand.hbm [shape: f32[16,8,160], index: 0, kind: input, shape index: {}]
  %s1 = inlined_call_operand.hbm [shape: bf16[320,128], index: 1, kind: input, shape index: {}]
  %s2 = inlined_call_operand.vmem [shape: f32[1,128], index: 2, kind: input, shape index: {}]
  %s3 = inlined_call_operand.vmem [shape: bf16[128,128], index: 3, kind: input, shape index: {}]
  %s4 = inlined_call_operand.vmem [shape: f32[1,128], index: 4, kind: input, shape index: {}]
  %s5 = inlined_call_operand.vmem [shape: f32[16,128], index: 5, kind: input, shape index: {}]
  %s6 = inlined_call_operand.hbm [shape: f32[16,128], index: 6, kind: output, shape index: {}]
  %s7 = sld [smem:[#allocation0]]
  $region65: #{inference_net_forward.1} parent=0
    _
  %s9 = ssub.s32 1, %s7
  %s10 = scalar_select 0, %s9, %s7
  $region1: #{inference_net_forward.1} parent=0
    #allocation2 [shape = 'u8[131072]{0}', space=vmem, size = 0x20000, scoped, tag = 'input window, operand 0']
    #allocation3 [shape = 's32[2]{0}', space=sflag, size = 0x8, scoped, tag = 'scoped memory for inference_net_forward.1']
    #allocation4 [shape = 's32[2]{0}', space=sflag, size = 0x8, scoped, tag = 'scoped memory for inference_net_forward.1']
    #allocation5 [shape = 'u8[81920]{0}', space=vmem, size = 0x14000, scoped, tag = 'input window, operand 1, single buffered']
    #allocation6 [shape = 's32[1]{0}', space=sflag, size = 0x4, scoped, tag = 'scoped memory for inference_net_forward.1']
    #allocation7 [shape = 'u8[8192]{0}', space=vmem, size = 0x2000, scoped, tag = 'output window, operand 0']
    %11 = vsyncpa [#allocation3], 0
    %s12 = scalar_lea.sflag [#allocation3], 1
    %13 = vsyncpa %s12, 0
    %14 = vsyncpa [#allocation6], 0
    %15 = vsyncpa [#allocation4], 0
    %s16 = scalar_lea.sflag [#allocation4], 1
    %17 = vsyncpa %s16, 0
    loop: start=0, step=1, limit=4
    $region2: #{inference_net_forward.1} parent=1 // loop_pre_header
      _
    $region3: #{inference_net_forward.1} parent=1 // loop_header
      %s19 = sphi 0, %s23
      %p20 = scmp.ge.s32.totalorder %s19, 4
      %s29 = sphi 0, %s31
      %s32 = sphi 0, %s29
      %s33 = sphi 0, %s32
      %s49 = sphi 0, %s33
      %s53 = sphi 0, %s53
      %s55 = sphi 0, %s53
      %s56 = sphi 0, %s55
      %s70 = sphi 0, %s56
      %s74 = sphi 0, %s74
      %s76 = sphi 0, %s74
      %s77 = sphi 0, %s76
      %s91 = sphi 0, %s77
      %s95 = sphi 0, %s95
      %s97 = sphi 0, %s95
      %s98 = sphi 0, %s97
      %s112 = sphi 0, %s98
      %s116 = sphi 0, %s116
      %s118 = sphi 0, %s116
      %s119 = sphi 0, %s118
      %s133 = sphi 0, %s119
      %s139 = sphi 0, %s141
      %s142 = sphi 0, %s139
      %s143 = sphi 0, %s142
      %s159 = sphi 0, %s143
      %s165 = sphi 0, %s167
      %s168 = sphi 0, %s165
      %s169 = sphi 0, %s168
      %s185 = sphi 0, %s169
    $region4: #{inference_net_forward.1} parent=1 // loop_header_branch
      %22 = sbr.rel (%p20) target = $region8
    $region5: #{inference_net_forward.1} parent=1 // loop_body
      %s24 = ssub.s32 %s19, 1
      %s25 = ssub.s32 %s19, 2
      %s26 = sadd.s32 %s19, 1
      %s27 = ssub.s32 %s19, %s26
      %p28 = scmp.eq.s32.totalorder %s27, 0
      %s30 = sadd.s32 %s29, 1
      %s31 = scalar_select %p28, %s29, %s30
      %p34 = pneg %p28
      %p35 = scmp.eq.s32.totalorder %s19, 1
      %p36 = por %p34, %p35
      %p37 = scmp.ne.s32.totalorder %s29, %s32
      %p38 = scmp.eq.s32.totalorder %s19, 0
      %p39 = por %p37, %p38
      %p40 = scmp.ne.s32.totalorder %s29, %s32
      %p41 = scmp.eq.s32.totalorder %s24, 1
      %p42 = por %p40, %p41
      %p43 = scmp.ne.s32.totalorder %s32, %s33
      %p44 = scmp.eq.s32.totalorder %s24, 0
      %p45 = por %p43, %p44
      %p46 = scmp.ne.s32.totalorder %s32, %s33
      %p47 = scmp.eq.s32.totalorder %s25, 1
      %p48 = por %p46, %p47
      %p50 = scmp.ne.s32.totalorder %s33, %s49
      %p51 = scmp.eq.s32.totalorder %s25, 0
      %p52 = por %p50, %p51
      %s54 = sadd.s32 %s53, 1
      %p57 = scmp.eq.s32.totalorder %s19, 1
      %p58 = scmp.ne.s32.totalorder %s53, %s55
      %p59 = scmp.eq.s32.totalorder %s19, 0
      %p60 = por %p58, %p59
      %p61 = scmp.ne.s32.totalorder %s53, %s55
      %p62 = scmp.eq.s32.totalorder %s24, 1
      %p63 = por %p61, %p62
      %p64 = scmp.ne.s32.totalorder %s55, %s56
      %p65 = scmp.eq.s32.totalorder %s24, 0
      %p66 = por %p64, %p65
      %p67 = scmp.ne.s32.totalorder %s55, %s56
      %p68 = scmp.eq.s32.totalorder %s25, 1
      %p69 = por %p67, %p68
      %p71 = scmp.ne.s32.totalorder %s56, %s70
      %p72 = scmp.eq.s32.totalorder %s25, 0
      %p73 = por %p71, %p72
      %s75 = sadd.s32 %s74, 1
      %p78 = scmp.eq.s32.totalorder %s19, 1
      %p79 = scmp.ne.s32.totalorder %s74, %s76
      %p80 = scmp.eq.s32.totalorder %s19, 0
      %p81 = por %p79, %p80
      %p82 = scmp.ne.s32.totalorder %s74, %s76
      %p83 = scmp.eq.s32.totalorder %s24, 1
      %p84 = por %p82, %p83
      %p85 = scmp.ne.s32.totalorder %s76, %s77
      %p86 = scmp.eq.s32.totalorder %s24, 0
      %p87 = por %p85, %p86
      %p88 = scmp.ne.s32.totalorder %s76, %s77
      %p89 = scmp.eq.s32.totalorder %s25, 1
      %p90 = por %p88, %p89
      %p92 = scmp.ne.s32.totalorder %s77, %s91
      %p93 = scmp.eq.s32.totalorder %s25, 0
      %p94 = por %p92, %p93
      %s96 = sadd.s32 %s95, 1
      %p99 = scmp.eq.s32.totalorder %s19, 1
      %p100 = scmp.ne.s32.totalorder %s95, %s97
      %p101 = scmp.eq.s32.totalorder %s19, 0
      %p102 = por %p100, %p101
      %p103 = scmp.ne.s32.totalorder %s95, %s97
      %p104 = scmp.eq.s32.totalorder %s24, 1
      %p105 = por %p103, %p104
      %p106 = scmp.ne.s32.totalorder %s97, %s98
      %p107 = scmp.eq.s32.totalorder %s24, 0
      %p108 = por %p106, %p107
      %p109 = scmp.ne.s32.totalorder %s97, %s98
      %p110 = scmp.eq.s32.totalorder %s25, 1
      %p111 = por %p109, %p110
      %p113 = scmp.ne.s32.totalorder %s98, %s112
      %p114 = scmp.eq.s32.totalorder %s25, 0
      %p115 = por %p113, %p114
      %s117 = sadd.s32 %s116, 1
      %p120 = scmp.eq.s32.totalorder %s19, 1
      %p121 = scmp.ne.s32.totalorder %s116, %s118
      %p122 = scmp.eq.s32.totalorder %s19, 0
      %p123 = por %p121, %p122
      %p124 = scmp.ne.s32.totalorder %s116, %s118
      %p125 = scmp.eq.s32.totalorder %s24, 1
      %p126 = por %p124, %p125
      %p127 = scmp.ne.s32.totalorder %s118, %s119
      %p128 = scmp.eq.s32.totalorder %s24, 0
      %p129 = por %p127, %p128
      %p130 = scmp.ne.s32.totalorder %s118, %s119
      %p131 = scmp.eq.s32.totalorder %s25, 1
      %p132 = por %p130, %p131
      %p134 = scmp.ne.s32.totalorder %s119, %s133
      %p135 = scmp.eq.s32.totalorder %s25, 0
      %p136 = por %p134, %p135
      %s137 = ssub.s32 %s19, %s26
      %p138 = scmp.eq.s32.totalorder %s137, 0
      %s140 = sadd.s32 %s139, 1
      %s141 = scalar_select %p138, %s139, %s140
      %p144 = pneg %p138
      %p145 = scmp.eq.s32.totalorder %s19, 1
      %p146 = por %p144, %p145
      %p147 = scmp.ne.s32.totalorder %s139, %s142
      %p148 = scmp.eq.s32.totalorder %s19, 0
      %p149 = por %p147, %p148
      %p150 = scmp.ne.s32.totalorder %s139, %s142
      %p151 = scmp.eq.s32.totalorder %s24, 1
      %p152 = por %p150, %p151
      %p153 = scmp.ne.s32.totalorder %s142, %s143
      %p154 = scmp.eq.s32.totalorder %s24, 0
      %p155 = por %p153, %p154
      %p156 = scmp.ne.s32.totalorder %s142, %s143
      %p157 = scmp.eq.s32.totalorder %s25, 1
      %p158 = por %p156, %p157
      %p160 = scmp.ne.s32.totalorder %s143, %s159
      %p161 = scmp.eq.s32.totalorder %s25, 0
      %p162 = por %p160, %p161
      %s163 = ssub.s32 %s19, %s26
      %p164 = scmp.eq.s32.totalorder %s163, 0
      %s166 = sadd.s32 %s165, 1
      %s167 = scalar_select %p164, %s165, %s166
      %p170 = pneg %p164
      %p171 = scmp.eq.s32.totalorder %s19, 1
      %p172 = por %p170, %p171
      %p173 = scmp.ne.s32.totalorder %s165, %s168
      %p174 = scmp.eq.s32.totalorder %s19, 0
      %p175 = por %p173, %p174
      %p176 = scmp.ne.s32.totalorder %s165, %s168
      %p177 = scmp.eq.s32.totalorder %s24, 1
      %p178 = por %p176, %p177
      %p179 = scmp.ne.s32.totalorder %s168, %s169
      %p180 = scmp.eq.s32.totalorder %s24, 0
      %p181 = por %p179, %p180
      %p182 = scmp.ne.s32.totalorder %s168, %s169
      %p183 = scmp.eq.s32.totalorder %s25, 1
      %p184 = por %p182, %p183
      %p186 = scmp.ne.s32.totalorder %s169, %s185
      %p187 = scmp.eq.s32.totalorder %s25, 0
      %p188 = por %p186, %p187
      %p189 = scmp.le.s32.totalorder 1, %s19
      %p190 = scmp.lt.s32.totalorder %s19, 3
      %p191 = pnand %p189, %p190
      %p192 = pneg %p191
      // Predicated region
      $region9: #{inference_net_forward.1} parent=5 // pred_check
        _
      $region10: #{inference_net_forward.1} parent=5 // pred_check_branch
        %194 = sbr.rel (%p191) target = $region12
      $region11: #{inference_net_forward.1} parent=5 // pred_region
        %s195 = ssub.s32 %s19, 1
        // Predicated region
        $region13: #{inference_net_forward.1} parent=11 // pred_check
          %p196 = pneg %p66
        $region14: #{inference_net_forward.1} parent=11 // pred_check_branch
          %198 = sbr.rel (%p196) target = $region16
        $region15: #{inference_net_forward.1} parent=11 // pred_region
          %200 = vsyncadd [#allocation6], 0
          %s201 = sshll.u32 %s1, 4
          %s202 = int_to_ptr.hbm [resolvable:$true] %s201
          %s203 = sshll.u32 [#allocation5], 4
          %s204 = int_to_ptr.vmem [resolvable:$true] %s203
          %209 = dma.hbm_to_vmem [thread:$0]  %s202, 2560, %s204, [#allocation6], 64, 64, 4
        $region16: #{inference_net_forward.1} parent=11 // pred_fallthru
          _
        // Predicated region
        $region17: #{inference_net_forward.1} parent=11 // pred_check
          %p210 = pneg %p87
        $region18: #{inference_net_forward.1} parent=11 // pred_check_branch
          %212 = sbr.rel (%p210) target = $region20
        $region19: #{inference_net_forward.1} parent=11 // pred_region
          _
        $region20: #{inference_net_forward.1} parent=11 // pred_fallthru
          _
        // Predicated region
        $region21: #{inference_net_forward.1} parent=11 // pred_check
          %p213 = pneg %p108
        $region22: #{inference_net_forward.1} parent=11 // pred_check_branch
          %215 = sbr.rel (%p213) target = $region24
        $region23: #{inference_net_forward.1} parent=11 // pred_region
          _
        $region24: #{inference_net_forward.1} parent=11 // pred_fallthru
          _
        // Predicated region
        $region25: #{inference_net_forward.1} parent=11 // pred_check
          %p216 = pneg %p129
        $region26: #{inference_net_forward.1} parent=11 // pred_check_branch
          %218 = sbr.rel (%p216) target = $region28
        $region27: #{inference_net_forward.1} parent=11 // pred_region
          _
        $region28: #{inference_net_forward.1} parent=11 // pred_fallthru
          _
      $region12: #{inference_net_forward.1} parent=5 // pred_fallthru
        _
      %p219 = scmp.lt.s32.totalorder %s19, 2
      // Predicated region
      $region29: #{inference_net_forward.1} parent=5 // pred_check
        %p220 = pneg %p219
      $region30: #{inference_net_forward.1} parent=5 // pred_check_branch
        %222 = sbr.rel (%p220) target = $region32
      $region31: #{inference_net_forward.1} parent=5 // pred_region
        // Predicated region
        $region33: #{inference_net_forward.1} parent=31 // pred_check
          %p223 = pneg %p39
        $region34: #{inference_net_forward.1} parent=31 // pred_check_branch
          %225 = sbr.rel (%p223) target = $region36
        $region35: #{inference_net_forward.1} parent=31 // pred_region
          %s226 = sand.u32 %s29, 1
          %s227 = scalar_lea.sflag [#allocation3], %s226
          %s228 = sand.u32 %s29, 1
          %s229 = smul.addr %s228, 128
          %s230 = scalar_lea.vmem [#allocation2], %s229
          %s231 = smul.u32 8, %s19
          %233 = vsyncadd %s227, 0
          %s234 = smul.addr %s231, 2
          %s235 = smul.addr %s234, 8
          %s236 = scalar_lea.hbm %s0, %s235
          %s237 = sshll.u32 %s236, 4
          %s238 = int_to_ptr.hbm [resolvable:$true] %s237
          %s239 = sshll.u32 %s230, 4
          %s240 = int_to_ptr.vmem [resolvable:$true] %s239
          %245 = dma.hbm_to_vmem [thread:$0]  %s238, 2048, %s240, %s227, 256, 256, 16
        $region36: #{inference_net_forward.1} parent=31 // pred_fallthru
          _
        // Predicated region
        $region37: #{inference_net_forward.1} parent=31 // pred_check
          %p246 = pneg %p149
        $region38: #{inference_net_forward.1} parent=31 // pred_check_branch
          %248 = sbr.rel (%p246) target = $region40
        $region39: #{inference_net_forward.1} parent=31 // pred_region
          %p249 = scmp.lt.s32.totalorder %s19, 1
          %s250 = scalar_select %p249, %s19, 1
          %s251 = smul.addr %s250, 8
          %s252 = scalar_lea.vmem %s5, %s251
        $region40: #{inference_net_forward.1} parent=31 // pred_fallthru
          _
      $region32: #{inference_net_forward.1} parent=5 // pred_fallthru
        _
      %p253 = scmp.le.s32.totalorder 1, %s19
      %p254 = scmp.lt.s32.totalorder %s19, 3
      %p255 = pnand %p253, %p254
      %p256 = pneg %p255
      // Predicated region
      $region41: #{inference_net_forward.1} parent=5 // pred_check
        _
      $region42: #{inference_net_forward.1} parent=5 // pred_check_branch
        %258 = sbr.rel (%p255) target = $region44
      $region43: #{inference_net_forward.1} parent=5 // pred_region
        %s259 = ssub.s32 %s19, 1
        %s260 = sand.u32 %s32, 1
        %s261 = scalar_lea.sflag [#allocation3], %s260
        %s262 = sand.u32 %s32, 1
        %s263 = smul.addr %s262, 128
        %s264 = scalar_lea.vmem [#allocation2], %s263
        // Predicated region
        $region45: #{inference_net_forward.1} parent=43 // pred_check
          %p265 = pneg %p45
        $region46: #{inference_net_forward.1} parent=43 // pred_check_branch
          %267 = sbr.rel (%p265) target = $region48
        $region47: #{inference_net_forward.1} parent=43 // pred_region
          %269 = dma.done %s261, 2048
        $region48: #{inference_net_forward.1} parent=43 // pred_fallthru
          _
        // Predicated region
        $region49: #{inference_net_forward.1} parent=43 // pred_check
          %p270 = pneg %p66
        $region50: #{inference_net_forward.1} parent=43 // pred_check_branch
          %272 = sbr.rel (%p270) target = $region52
        $region51: #{inference_net_forward.1} parent=43 // pred_region
          %274 = dma.done [#allocation6], 2560
        $region52: #{inference_net_forward.1} parent=43 // pred_fallthru
          _
        %s275 = sand.u32 %s32, 1
        %s276 = scalar_lea.sflag [#allocation3], %s275
        %s277 = sand.u32 %s32, 1
        %s278 = smul.addr %s277, 128
        %s279 = scalar_lea.vmem [#allocation2], %s278
        %p280 = pneg %p45
        %p281 = pneg %p42
        %p282 = pneg %p66
        %p283 = pneg %p63
        %p284 = pneg %p87
        %p285 = pneg %p84
        %p286 = pneg %p108
        %p287 = pneg %p105
        %p288 = pneg %p129
        %p289 = pneg %p126
        %p290 = scmp.lt.s32.totalorder %s24, 1
        %s291 = scalar_select %p290, %s24, 1
        %s292 = smul.addr %s291, 8
        %s293 = scalar_lea.vmem %s5, %s292
        %p294 = pneg %p155
        %p295 = pneg %p152
        %p296 = pneg %p181
        %p297 = pneg %p178
        %s298 = sand.u32 %s168, 1
        %s299 = scalar_lea.sflag [#allocation4], %s298
        %s300 = sand.u32 %s168, 1
        %s301 = smul.addr %s300, 8
        %s302 = scalar_lea.vmem [#allocation7], %s301
        %s303 = smul.u32 8, %s24
        %p304 = scmp.lt.s32.totalorder %s24, 1
        %s305 = scalar_select %p304, %s24, 1
        %s306 = smul.addr %s305, 8
        %s307 = scalar_lea.vmem %s5, %s306
        %v309 = vld [vmem:[%s264] sm:$0xff]
        %v310 = vld [vmem:[%s264 + $0x8] sm:$0xff]
        %v311 = vld [vmem:[%s264 + $0x10] sm:$0xff]
        %v312 = vld [vmem:[%s264 + $0x18] sm:$0xff]
        %v313 = vld [vmem:[%s264 + $0x20] sm:$0xff]
        %v314 = vld [vmem:[%s264 + $0x28] sm:$0xff]
        %v315 = vld [vmem:[%s264 + $0x30] sm:$0xff]
        %v316 = vld [vmem:[%s264 + $0x38] sm:$0xff]
        %v317 = vld [vmem:[%s264 + $0x40] sm:$0xff]
        %v318 = vld [vmem:[%s264 + $0x48] sm:$0xff]
        %v319 = vld [vmem:[%s264 + $0x50] sm:$0xff]
        %v320 = vld [vmem:[%s264 + $0x58] sm:$0xff]
        %v321 = vld [vmem:[%s264 + $0x60] sm:$0xff]
        %v322 = vld [vmem:[%s264 + $0x68] sm:$0xff]
        %v323 = vld [vmem:[%s264 + $0x70] sm:$0xff]
        %v324 = vld [vmem:[%s264 + $0x78] sm:$0xff]
        %v325 = vrot.slane %v309, 4
        %v326 = vadd.f32 %v309, %v325
        %v327 = vrot.slane %v326, 2
        %v328 = vadd.f32 %v326, %v327
        %v329 = vrot.slane %v328, 1
        %v330 = vadd.f32 %v328, %v329
        %vm331 = vcmask 261120
        %v332 = vsel %vm331, %v310, 0.0
        %v333 = vrot.slane %v332, 4
        %v334 = vadd.f32 %v332, %v333
        %v335 = vrot.slane %v334, 2
        %v336 = vadd.f32 %v334, %v335
        %v337 = vrot.slane %v336, 1
        %v338 = vadd.f32 %v336, %v337
        %v339 = vrot.slane %v311, 4
        %v340 = vadd.f32 %v311, %v339
        %v341 = vrot.slane %v340, 2
        %v342 = vadd.f32 %v340, %v341
        %v343 = vrot.slane %v342, 1
        %v344 = vadd.f32 %v342, %v343
        %v345 = vsel %vm331, %v312, 0.0
        %v346 = vrot.slane %v345, 4
        %v347 = vadd.f32 %v345, %v346
        %v348 = vrot.slane %v347, 2
        %v349 = vadd.f32 %v347, %v348
        %v350 = vrot.slane %v349, 1
        %v351 = vadd.f32 %v349, %v350
        %v352 = vrot.slane %v313, 4
        %v353 = vadd.f32 %v313, %v352
        %v354 = vrot.slane %v353, 2
        %v355 = vadd.f32 %v353, %v354
        %v356 = vrot.slane %v355, 1
        %v357 = vadd.f32 %v355, %v356
        %v358 = vsel %vm331, %v314, 0.0
        %v359 = vrot.slane %v358, 4
        %v360 = vadd.f32 %v358, %v359
        %v361 = vrot.slane %v360, 2
        %v362 = vadd.f32 %v360, %v361
        %v363 = vrot.slane %v362, 1
        %v364 = vadd.f32 %v362, %v363
        %v365 = vrot.slane %v315, 4
        %v366 = vadd.f32 %v315, %v365
        %v367 = vrot.slane %v366, 2
        %v368 = vadd.f32 %v366, %v367
        %v369 = vrot.slane %v368, 1
        %v370 = vadd.f32 %v368, %v369
        %v371 = vsel %vm331, %v316, 0.0
        %v372 = vrot.slane %v371, 4
        %v373 = vadd.f32 %v371, %v372
        %v374 = vrot.slane %v373, 2
        %v375 = vadd.f32 %v373, %v374
        %v376 = vrot.slane %v375, 1
        %v377 = vadd.f32 %v375, %v376
        %v378 = vrot.slane %v317, 4
        %v379 = vadd.f32 %v317, %v378
        %v380 = vrot.slane %v379, 2
        %v381 = vadd.f32 %v379, %v380
        %v382 = vrot.slane %v381, 1
        %v383 = vadd.f32 %v381, %v382
        %v384 = vsel %vm331, %v318, 0.0
        %v385 = vrot.slane %v384, 4
        %v386 = vadd.f32 %v384, %v385
        %v387 = vrot.slane %v386, 2
        %v388 = vadd.f32 %v386, %v387
        %v389 = vrot.slane %v388, 1
        %v390 = vadd.f32 %v388, %v389
        %v391 = vrot.slane %v319, 4
        %v392 = vadd.f32 %v319, %v391
        %v393 = vrot.slane %v392, 2
        %v394 = vadd.f32 %v392, %v393
        %v395 = vrot.slane %v394, 1
        %v396 = vadd.f32 %v394, %v395
        %v397 = vsel %vm331, %v320, 0.0
        %v398 = vrot.slane %v397, 4
        %v399 = vadd.f32 %v397, %v398
        %v400 = vrot.slane %v399, 2
        %v401 = vadd.f32 %v399, %v400
        %v402 = vrot.slane %v401, 1
        %v403 = vadd.f32 %v401, %v402
        %v404 = vrot.slane %v321, 4
        %v405 = vadd.f32 %v321, %v404
        %v406 = vrot.slane %v405, 2
        %v407 = vadd.f32 %v405, %v406
        %v408 = vrot.slane %v407, 1
        %v409 = vadd.f32 %v407, %v408
        %v410 = vsel %vm331, %v322, 0.0
        %v411 = vrot.slane %v410, 4
        %v412 = vadd.f32 %v410, %v411
        %v413 = vrot.slane %v412, 2
        %v414 = vadd.f32 %v412, %v413
        %v415 = vrot.slane %v414, 1
        %v416 = vadd.f32 %v414, %v415
        %v417 = vrot.slane %v323, 4
        %v418 = vadd.f32 %v323, %v417
        %v419 = vrot.slane %v418, 2
        %v420 = vadd.f32 %v418, %v419
        %v421 = vrot.slane %v420, 1
        %v422 = vadd.f32 %v420, %v421
        %v423 = vsel %vm331, %v324, 0.0
        %v424 = vrot.slane %v423, 4
        %v425 = vadd.f32 %v423, %v424
        %v426 = vrot.slane %v425, 2
        %v427 = vadd.f32 %v425, %v426
        %v428 = vrot.slane %v427, 1
        %v429 = vadd.f32 %v427, %v428
        %v430 = vmul.f32 %v330, 0.125
        %v431 = vmul.f32 %v338, 0.125
        %v432 = vmul.f32 %v344, 0.125
        %v433 = vmul.f32 %v351, 0.125
        %v434 = vmul.f32 %v357, 0.125
        %v435 = vmul.f32 %v364, 0.125
        %v436 = vmul.f32 %v370, 0.125
        %v437 = vmul.f32 %v377, 0.125
        %v438 = vmul.f32 %v383, 0.125
        %v439 = vmul.f32 %v390, 0.125
        %v440 = vmul.f32 %v396, 0.125
        %v441 = vmul.f32 %v403, 0.125
        %v442 = vmul.f32 %v409, 0.125
        %v443 = vmul.f32 %v416, 0.125
        %v444 = vmul.f32 %v422, 0.125
        %v445 = vmul.f32 %v429, 0.125
        %v446 = vsub.f32 %v309, %v430
        %v447 = vsub.f32 %v310, %v431
        %v448 = vsub.f32 %v311, %v432
        %v449 = vsub.f32 %v312, %v433
        %v450 = vsub.f32 %v313, %v434
        %v451 = vsub.f32 %v314, %v435
        %v452 = vsub.f32 %v315, %v436
        %v453 = vsub.f32 %v316, %v437
        %v454 = vsub.f32 %v317, %v438
        %v455 = vsub.f32 %v318, %v439
        %v456 = vsub.f32 %v319, %v440
        %v457 = vsub.f32 %v320, %v441
        %v458 = vsub.f32 %v321, %v442
        %v459 = vsub.f32 %v322, %v443
        %v460 = vsub.f32 %v323, %v444
        %v461 = vsub.f32 %v324, %v445
        %v462 = vmul.f32 %v446, %v446
        %v463 = vmul.f32 %v447, %v447
        %v464 = vmul.f32 %v448, %v448
        %v465 = vmul.f32 %v449, %v449
        %v466 = vmul.f32 %v450, %v450
        %v467 = vmul.f32 %v451, %v451
        %v468 = vmul.f32 %v452, %v452
        %v469 = vmul.f32 %v453, %v453
        %v470 = vmul.f32 %v454, %v454
        %v471 = vmul.f32 %v455, %v455
        %v472 = vmul.f32 %v456, %v456
        %v473 = vmul.f32 %v457, %v457
        %v474 = vmul.f32 %v458, %v458
        %v475 = vmul.f32 %v459, %v459
        %v476 = vmul.f32 %v460, %v460
        %v477 = vmul.f32 %v461, %v461
        %v478 = vrot.slane %v462, 4
        %v479 = vadd.f32 %v462, %v478
        %v480 = vrot.slane %v479, 2
        %v481 = vadd.f32 %v479, %v480
        %v482 = vrot.slane %v481, 1
        %v483 = vadd.f32 %v481, %v482
        %v484 = vsel %vm331, %v463, 0.0
        %v485 = vrot.slane %v484, 4
        %v486 = vadd.f32 %v484, %v485
        %v487 = vrot.slane %v486, 2
        %v488 = vadd.f32 %v486, %v487
        %v489 = vrot.slane %v488, 1
        %v490 = vadd.f32 %v488, %v489
        %v491 = vrot.slane %v464, 4
        %v492 = vadd.f32 %v464, %v491
        %v493 = vrot.slane %v492, 2
        %v494 = vadd.f32 %v492, %v493
        %v495 = vrot.slane %v494, 1
        %v496 = vadd.f32 %v494, %v495
        %v497 = vsel %vm331, %v465, 0.0
        %v498 = vrot.slane %v497, 4
        %v499 = vadd.f32 %v497, %v498
        %v500 = vrot.slane %v499, 2
        %v501 = vadd.f32 %v499, %v500
        %v502 = vrot.slane %v501, 1
        %v503 = vadd.f32 %v501, %v502
        %v504 = vrot.slane %v466, 4
        %v505 = vadd.f32 %v466, %v504
        %v506 = vrot.slane %v505, 2
        %v507 = vadd.f32 %v505, %v506
        %v508 = vrot.slane %v507, 1
        %v509 = vadd.f32 %v507, %v508
        %v510 = vsel %vm331, %v467, 0.0
        %v511 = vrot.slane %v510, 4
        %v512 = vadd.f32 %v510, %v511
        %v513 = vrot.slane %v512, 2
        %v514 = vadd.f32 %v512, %v513
        %v515 = vrot.slane %v514, 1
        %v516 = vadd.f32 %v514, %v515
        %v517 = vrot.slane %v468, 4
        %v518 = vadd.f32 %v468, %v517
        %v519 = vrot.slane %v518, 2
        %v520 = vadd.f32 %v518, %v519
        %v521 = vrot.slane %v520, 1
        %v522 = vadd.f32 %v520, %v521
        %v523 = vsel %vm331, %v469, 0.0
        %v524 = vrot.slane %v523, 4
        %v525 = vadd.f32 %v523, %v524
        %v526 = vrot.slane %v525, 2
        %v527 = vadd.f32 %v525, %v526
        %v528 = vrot.slane %v527, 1
        %v529 = vadd.f32 %v527, %v528
        %v530 = vrot.slane %v470, 4
        %v531 = vadd.f32 %v470, %v530
        %v532 = vrot.slane %v531, 2
        %v533 = vadd.f32 %v531, %v532
        %v534 = vrot.slane %v533, 1
        %v535 = vadd.f32 %v533, %v534
        %v536 = vsel %vm331, %v471, 0.0
        %v537 = vrot.slane %v536, 4
        %v538 = vadd.f32 %v536, %v537
        %v539 = vrot.slane %v538, 2
        %v540 = vadd.f32 %v538, %v539
        %v541 = vrot.slane %v540, 1
        %v542 = vadd.f32 %v540, %v541
        %v543 = vrot.slane %v472, 4
        %v544 = vadd.f32 %v472, %v543
        %v545 = vrot.slane %v544, 2
        %v546 = vadd.f32 %v544, %v545
        %v547 = vrot.slane %v546, 1
        %v548 = vadd.f32 %v546, %v547
        %v549 = vsel %vm331, %v473, 0.0
        %v550 = vrot.slane %v549, 4
        %v551 = vadd.f32 %v549, %v550
        %v552 = vrot.slane %v551, 2
        %v553 = vadd.f32 %v551, %v552
        %v554 = vrot.slane %v553, 1
        %v555 = vadd.f32 %v553, %v554
        %v556 = vrot.slane %v474, 4
        %v557 = vadd.f32 %v474, %v556
        %v558 = vrot.slane %v557, 2
        %v559 = vadd.f32 %v557, %v558
        %v560 = vrot.slane %v559, 1
        %v561 = vadd.f32 %v559, %v560
        %v562 = vsel %vm331, %v475, 0.0
        %v563 = vrot.slane %v562, 4
        %v564 = vadd.f32 %v562, %v563
        %v565 = vrot.slane %v564, 2
        %v566 = vadd.f32 %v564, %v565
        %v567 = vrot.slane %v566, 1
        %v568 = vadd.f32 %v566, %v567
        %v569 = vrot.slane %v476, 4
        %v570 = vadd.f32 %v476, %v569
        %v571 = vrot.slane %v570, 2
        %v572 = vadd.f32 %v570, %v571
        %v573 = vrot.slane %v572, 1
        %v574 = vadd.f32 %v572, %v573
        %v575 = vsel %vm331, %v477, 0.0
        %v576 = vrot.slane %v575, 4
        %v577 = vadd.f32 %v575, %v576
        %v578 = vrot.slane %v577, 2
        %v579 = vadd.f32 %v577, %v578
        %v580 = vrot.slane %v579, 1
        %v581 = vadd.f32 %v579, %v580
        %v582 = vmul.f32 %v483, 0.14285715
        %v583 = vmul.f32 %v490, 0.14285715
        %v584 = vmul.f32 %v496, 0.14285715
        %v585 = vmul.f32 %v503, 0.14285715
        %v586 = vmul.f32 %v509, 0.14285715
        %v587 = vmul.f32 %v516, 0.14285715
        %v588 = vmul.f32 %v522, 0.14285715
        %v589 = vmul.f32 %v529, 0.14285715
        %v590 = vmul.f32 %v535, 0.14285715
        %v591 = vmul.f32 %v542, 0.14285715
        %v592 = vmul.f32 %v548, 0.14285715
        %v593 = vmul.f32 %v555, 0.14285715
        %v594 = vmul.f32 %v561, 0.14285715
        %v595 = vmul.f32 %v568, 0.14285715
        %v596 = vmul.f32 %v574, 0.14285715
        %v597 = vmul.f32 %v581, 0.14285715
        %v598 = vpack.c.bf16 %v430, %v430
        %v599 = vpack.c.bf16 %v431, %v431
        %v600 = vpack.c.bf16 %v432, %v432
        %v601 = vpack.c.bf16 %v433, %v433
        %v602 = vpack.c.bf16 %v434, %v434
        %v603 = vpack.c.bf16 %v435, %v435
        %v604 = vpack.c.bf16 %v436, %v436
        %v605 = vpack.c.bf16 %v437, %v437
        %v606 = vpack.c.bf16 %v438, %v438
        %v607 = vpack.c.bf16 %v439, %v439
        %v608 = vpack.c.bf16 %v440, %v440
        %v609 = vpack.c.bf16 %v441, %v441
        %v610 = vpack.c.bf16 %v442, %v442
        %v611 = vpack.c.bf16 %v443, %v443
        %v612 = vpack.c.bf16 %v444, %v444
        %v613 = vpack.c.bf16 %v445, %v445
        %v614 = vld [vmem:[#allocation5] sm:$0xf]
        %v615 = vld [vmem:[#allocation5 + $0x4] sm:$0xf]
        %v616 = vld [vmem:[#allocation5 + $0x8] sm:$0xf]
        %v617 = vld [vmem:[#allocation5 + $0xc] sm:$0xf]
        %v618 = vld [vmem:[#allocation5 + $0x10] sm:$0xf]
        %v619 = vld [vmem:[#allocation5 + $0x14] sm:$0xf]
        %v620 = vld [vmem:[#allocation5 + $0x18] sm:$0xf]
        %v621 = vld [vmem:[#allocation5 + $0x1c] sm:$0xf]
        %v622 = vld [vmem:[#allocation5 + $0x20] sm:$0xf]
        %v623 = vld [vmem:[#allocation5 + $0x24] sm:$0xf]
        %v624 = vld [vmem:[#allocation5 + $0x28] sm:$0xf]
        %v625 = vld [vmem:[#allocation5 + $0x2c] sm:$0xf]
        %v626 = vld [vmem:[#allocation5 + $0x30] sm:$0xf]
        %v627 = vld [vmem:[#allocation5 + $0x34] sm:$0xf]
        %v628 = vld [vmem:[#allocation5 + $0x38] sm:$0xf]
        %v629 = vld [vmem:[#allocation5 + $0x3c] sm:$0xf]
        %v630 = vld [vmem:[#allocation5 + $0x40] sm:$0xf]
        %v631 = vld [vmem:[#allocation5 + $0x44] sm:$0xf]
        %v632 = vld [vmem:[#allocation5 + $0x48] sm:$0xf]
        %v633 = vld [vmem:[#allocation5 + $0x4c] sm:$0xf]
        %v634 = vpack.c.bf16 %v582, %v582
        %v635 = vpack.c.bf16 %v583, %v583
        %v636 = vpack.c.bf16 %v584, %v584
        %v637 = vpack.c.bf16 %v585, %v585
        %v638 = vpack.c.bf16 %v586, %v586
        %v639 = vpack.c.bf16 %v587, %v587
        %v640 = vpack.c.bf16 %v588, %v588
        %v641 = vpack.c.bf16 %v589, %v589
        %v642 = vpack.c.bf16 %v590, %v590
        %v643 = vpack.c.bf16 %v591, %v591
        %v644 = vpack.c.bf16 %v592, %v592
        %v645 = vpack.c.bf16 %v593, %v593
        %v646 = vpack.c.bf16 %v594, %v594
        %v647 = vpack.c.bf16 %v595, %v595
        %v648 = vpack.c.bf16 %v596, %v596
        %v649 = vpack.c.bf16 %v597, %v597
        %v650 = vld [vmem:[#allocation5 + $0x50] sm:$0xf]
        %v651 = vld [vmem:[#allocation5 + $0x54] sm:$0xf]
        %v652 = vld [vmem:[#allocation5 + $0x58] sm:$0xf]
        %v653 = vld [vmem:[#allocation5 + $0x5c] sm:$0xf]
        %v654 = vld [vmem:[#allocation5 + $0x60] sm:$0xf]
        %v655 = vld [vmem:[#allocation5 + $0x64] sm:$0xf]
        %v656 = vld [vmem:[#allocation5 + $0x68] sm:$0xf]
        %v657 = vld [vmem:[#allocation5 + $0x6c] sm:$0xf]
        %v658 = vld [vmem:[#allocation5 + $0x70] sm:$0xf]
        %v659 = vld [vmem:[#allocation5 + $0x74] sm:$0xf]
        %v660 = vld [vmem:[#allocation5 + $0x78] sm:$0xf]
        %v661 = vld [vmem:[#allocation5 + $0x7c] sm:$0xf]
        %v662 = vld [vmem:[#allocation5 + $0x80] sm:$0xf]
        %v663 = vld [vmem:[#allocation5 + $0x84] sm:$0xf]
        %v664 = vld [vmem:[#allocation5 + $0x88] sm:$0xf]
        %v665 = vld [vmem:[#allocation5 + $0x8c] sm:$0xf]
        %v666 = vld [vmem:[#allocation5 + $0x90] sm:$0xf]
        %v667 = vld [vmem:[#allocation5 + $0x94] sm:$0xf]
        %v668 = vld [vmem:[#allocation5 + $0x98] sm:$0xf]
        %v669 = vld [vmem:[#allocation5 + $0x9c] sm:$0xf]
        %v686 = vunpack.c.l.b16 %v634
        %v687 = vunpack.c.l.b16 %v635
        %v688 = vunpack.c.l.b16 %v636
        %v689 = vunpack.c.l.b16 %v637
        %v690 = vunpack.c.l.b16 %v638
        %v691 = vunpack.c.l.b16 %v639
        %v692 = vunpack.c.l.b16 %v640
        %v693 = vunpack.c.l.b16 %v641
        %v694 = vunpack.c.l.b16 %v642
        %v695 = vunpack.c.l.b16 %v643
        %v696 = vunpack.c.l.b16 %v644
        %v697 = vunpack.c.l.b16 %v645
        %v698 = vunpack.c.l.b16 %v646
        %v699 = vunpack.c.l.b16 %v647
        %v700 = vunpack.c.l.b16 %v648
        %v701 = vunpack.c.l.b16 %v649
        %vm702 = vcmask 1041409
        %v703 = vsel %vm702, %v688, %v686
        %vm704 = vcmask 1042434
        %v705 = vsel %vm704, %v690, %v703
        %vm706 = vcmask 1043459
        %v707 = vsel %vm706, %v692, %v705
        %vm708 = vcmask 1044484
        %v709 = vsel %vm708, %v694, %v707
        %vm710 = vcmask 1045509
        %v711 = vsel %vm710, %v696, %v709
        %vm712 = vcmask 1046534
        %v713 = vsel %vm712, %v698, %v711
        %vm714 = vcmask 1047559
        %v715 = vsel %vm714, %v700, %v713
        %v716 = vsel %vm702, %v689, %v687
        %v717 = vsel %vm704, %v691, %v716
        %v718 = vsel %vm706, %v693, %v717
        %v719 = vsel %vm708, %v695, %v718
        %v720 = vsel %vm710, %v697, %v719
        %v721 = vsel %vm712, %v699, %v720
        %v722 = vsel %vm714, %v701, %v721
        %v723 = vpack.c.b16 %v715, %v715
        %v724 = vpack.c.b16 %v722, %v722
        %v746 = vunpack.c.l.b16 %v650
        %v747 = vunpack.c.l.b16 %v651
        %v748 = vunpack.c.l.b16 %v652
        %v749 = vunpack.c.l.b16 %v653
        %v750 = vunpack.c.l.b16 %v654
        %v751 = vunpack.c.l.b16 %v655
        %v752 = vunpack.c.l.b16 %v656
        %v753 = vunpack.c.l.b16 %v657
        %v754 = vunpack.c.l.b16 %v658
        %v755 = vunpack.c.l.b16 %v659
        %v756 = vunpack.c.l.b16 %v660
        %v757 = vunpack.c.l.b16 %v661
        %v758 = vunpack.c.l.b16 %v662
        %v759 = vunpack.c.l.b16 %v663
        %v760 = vunpack.c.l.b16 %v664
        %v761 = vunpack.c.l.b16 %v665
        %v762 = vunpack.c.l.b16 %v666
        %v763 = vunpack.c.l.b16 %v667
        %v764 = vunpack.c.l.b16 %v668
        %v765 = vunpack.c.l.b16 %v669
        %v766 = vpack.c.b16 %v747, %v746
        %v767 = vpack.c.b16 %v749, %v748
        %v768 = vpack.c.b16 %v751, %v750
        %v769 = vpack.c.b16 %v753, %v752
        %v770 = vpack.c.b16 %v755, %v754
        %v771 = vpack.c.b16 %v757, %v756
        %v772 = vpack.c.b16 %v759, %v758
        %v773 = vpack.c.b16 %v761, %v760
        %v774 = vpack.c.b16 %v763, %v762
        %v775 = vpack.c.b16 %v765, %v764
        %v787 = vsel %vm331, %v724, 0
        %789 = vmatpush.bf16.msra.mxu0 %v773
        %790 = vmatpush.bf16.msra.mxu0 %v772
        %791 = vmatpush.bf16.msra.mxu0 %v771
        %792 = vmatpush.bf16.msra.mxu0 %v770
        %793 = vmatpush.bf16.msra.mxu0 %v769
        %794 = vmatpush.bf16.msra.mxu0 %v768
        %795 = vmatpush.bf16.msra.mxu0 %v767
        %796 = vmatpush.bf16.msra.mxu0 %v766
        %797 = vmatmul.bf16.gmra.mxu0 %v723
        %v798 = vpop.f32.mrf.mxu0
        %v799 = vadd.f32 0.0, %v798
        %v800 = vpop.f32.mrf.mxu0
        %801 = vdwg.mxu0
        %802 = vmatpush.bf16.msra.mxu0 0
        %803 = vmatpush.bf16.msra.mxu0 0
        %804 = vmatpush.bf16.msra.mxu0 0
        %805 = vmatpush.bf16.msra.mxu0 0
        %806 = vmatpush.bf16.msra.mxu0 0
        %807 = vmatpush.bf16.msra.mxu0 0
        %808 = vmatpush.bf16.msra.mxu0 %v775
        %809 = vmatpush.bf16.msra.mxu0 %v774
        %810 = vmatmul.bf16.gmra.mxu0 %v787
        %v811 = vpop.f32.mrf.mxu0
        %v812 = vadd.f32 %v799, %v811
        %v813 = vpop.f32.mrf.mxu0
        %814 = vdwg.mxu0
        %v831 = vunpack.c.l.b16 %v598
        %v832 = vunpack.c.l.b16 %v599
        %v833 = vunpack.c.l.b16 %v600
        %v834 = vunpack.c.l.b16 %v601
        %v835 = vunpack.c.l.b16 %v602
        %v836 = vunpack.c.l.b16 %v603
        %v837 = vunpack.c.l.b16 %v604
        %v838 = vunpack.c.l.b16 %v605
        %v839 = vunpack.c.l.b16 %v606
        %v840 = vunpack.c.l.b16 %v607
        %v841 = vunpack.c.l.b16 %v608
        %v842 = vunpack.c.l.b16 %v609
        %v843 = vunpack.c.l.b16 %v610
        %v844 = vunpack.c.l.b16 %v611
        %v845 = vunpack.c.l.b16 %v612
        %v846 = vunpack.c.l.b16 %v613
        %v847 = vsel %vm702, %v833, %v831
        %v848 = vsel %vm704, %v835, %v847
        %v849 = vsel %vm706, %v837, %v848
        %v850 = vsel %vm708, %v839, %v849
        %v851 = vsel %vm710, %v841, %v850
        %v852 = vsel %vm712, %v843, %v851
        %v853 = vsel %vm714, %v845, %v852
        %v854 = vsel %vm702, %v834, %v832
        %v855 = vsel %vm704, %v836, %v854
        %v856 = vsel %vm706, %v838, %v855
        %v857 = vsel %vm708, %v840, %v856
        %v858 = vsel %vm710, %v842, %v857
        %v859 = vsel %vm712, %v844, %v858
        %v860 = vsel %vm714, %v846, %v859
        %v861 = vpack.c.b16 %v853, %v853
        %v862 = vpack.c.b16 %v860, %v860
        %v884 = vunpack.c.l.b16 %v614
        %v885 = vunpack.c.l.b16 %v615
        %v886 = vunpack.c.l.b16 %v616
        %v887 = vunpack.c.l.b16 %v617
        %v888 = vunpack.c.l.b16 %v618
        %v889 = vunpack.c.l.b16 %v619
        %v890 = vunpack.c.l.b16 %v620
        %v891 = vunpack.c.l.b16 %v621
        %v892 = vunpack.c.l.b16 %v622
        %v893 = vunpack.c.l.b16 %v623
        %v894 = vunpack.c.l.b16 %v624
        %v895 = vunpack.c.l.b16 %v625
        %v896 = vunpack.c.l.b16 %v626
        %v897 = vunpack.c.l.b16 %v627
        %v898 = vunpack.c.l.b16 %v628
        %v899 = vunpack.c.l.b16 %v629
        %v900 = vunpack.c.l.b16 %v630
        %v901 = vunpack.c.l.b16 %v631
        %v902 = vunpack.c.l.b16 %v632
        %v903 = vunpack.c.l.b16 %v633
        %v904 = vpack.c.b16 %v885, %v884
        %v905 = vpack.c.b16 %v887, %v886
        %v906 = vpack.c.b16 %v889, %v888
        %v907 = vpack.c.b16 %v891, %v890
        %v908 = vpack.c.b16 %v893, %v892
        %v909 = vpack.c.b16 %v895, %v894
        %v910 = vpack.c.b16 %v897, %v896
        %v911 = vpack.c.b16 %v899, %v898
        %v912 = vpack.c.b16 %v901, %v900
        %v913 = vpack.c.b16 %v903, %v902
        %v925 = vsel %vm331, %v862, 0
        %927 = vmatpush.bf16.msra.mxu0 %v911
        %928 = vmatpush.bf16.msra.mxu0 %v910
        %929 = vmatpush.bf16.msra.mxu0 %v909
        %930 = vmatpush.bf16.msra.mxu0 %v908
        %931 = vmatpush.bf16.msra.mxu0 %v907
        %932 = vmatpush.bf16.msra.mxu0 %v906
        %933 = vmatpush.bf16.msra.mxu0 %v905
        %934 = vmatpush.bf16.msra.mxu0 %v904
        %935 = vmatmul.bf16.gmra.mxu0 %v861
        %v936 = vpop.f32.mrf.mxu0
        %v937 = vadd.f32 %v812, %v936
        %v938 = vpop.f32.mrf.mxu0
        %939 = vdwg.mxu0
        %940 = vmatpush.bf16.msra.mxu0 0
        %941 = vmatpush.bf16.msra.mxu0 0
        %942 = vmatpush.bf16.msra.mxu0 0
        %943 = vmatpush.bf16.msra.mxu0 0
        %944 = vmatpush.bf16.msra.mxu0 0
        %945 = vmatpush.bf16.msra.mxu0 0
        %946 = vmatpush.bf16.msra.mxu0 %v913
        %947 = vmatpush.bf16.msra.mxu0 %v912
        %948 = vmatmul.bf16.gmra.mxu0 %v925
        %v949 = vpop.f32.mrf.mxu0
        %v950 = vadd.f32 %v937, %v949
        %v951 = vpop.f32.mrf.mxu0
        %952 = vdwg.mxu0
        %v953 = vld [vmem:[%s2] sm:$0x1]
        %v955 = vperm.slane %v953, 0
        %v957 = vadd.f32 %v950, %v955
        %v958 = vmax.f32 %v957, 0.0
        %v959 = vpack.c.bf16 %v958, %v958
        %v960 = vld [vmem:[%s3] sm:$0xf]
        %v961 = vld [vmem:[%s3 + $0x4] sm:$0xf]
        %v962 = vld [vmem:[%s3 + $0x8] sm:$0xf]
        %v963 = vld [vmem:[%s3 + $0xc] sm:$0xf]
        %v964 = vld [vmem:[%s3 + $0x10] sm:$0xf]
        %v965 = vld [vmem:[%s3 + $0x14] sm:$0xf]
        %v966 = vld [vmem:[%s3 + $0x18] sm:$0xf]
        %v967 = vld [vmem:[%s3 + $0x1c] sm:$0xf]
        %v968 = vld [vmem:[%s3 + $0x20] sm:$0xf]
        %v969 = vld [vmem:[%s3 + $0x24] sm:$0xf]
        %v970 = vld [vmem:[%s3 + $0x28] sm:$0xf]
        %v971 = vld [vmem:[%s3 + $0x2c] sm:$0xf]
        %v972 = vld [vmem:[%s3 + $0x30] sm:$0xf]
        %v973 = vld [vmem:[%s3 + $0x34] sm:$0xf]
        %v974 = vld [vmem:[%s3 + $0x38] sm:$0xf]
        %v975 = vld [vmem:[%s3 + $0x3c] sm:$0xf]
        %v976 = vld [vmem:[%s4] sm:$0x1]
        %v978 = vperm.slane %v976, 0
        %v996 = vunpack.c.l.b16 %v960
        %v997 = vunpack.c.l.b16 %v961
        %v998 = vunpack.c.l.b16 %v962
        %v999 = vunpack.c.l.b16 %v963
        %v1000 = vunpack.c.l.b16 %v964
        %v1001 = vunpack.c.l.b16 %v965
        %v1002 = vunpack.c.l.b16 %v966
        %v1003 = vunpack.c.l.b16 %v967
        %v1004 = vunpack.c.l.b16 %v968
        %v1005 = vunpack.c.l.b16 %v969
        %v1006 = vunpack.c.l.b16 %v970
        %v1007 = vunpack.c.l.b16 %v971
        %v1008 = vunpack.c.l.b16 %v972
        %v1009 = vunpack.c.l.b16 %v973
        %v1010 = vunpack.c.l.b16 %v974
        %v1011 = vunpack.c.l.b16 %v975
        %v1012 = vpack.c.b16 %v997, %v996
        %v1013 = vpack.c.b16 %v999, %v998
        %v1014 = vpack.c.b16 %v1001, %v1000
        %v1015 = vpack.c.b16 %v1003, %v1002
        %v1016 = vpack.c.b16 %v1005, %v1004
        %v1017 = vpack.c.b16 %v1007, %v1006
        %v1018 = vpack.c.b16 %v1009, %v1008
        %v1019 = vpack.c.b16 %v1011, %v1010
        %1028 = vmatpush.bf16.msra.mxu0 %v1019
        %1029 = vmatpush.bf16.msra.mxu0 %v1018
        %1030 = vmatpush.bf16.msra.mxu0 %v1017
        %1031 = vmatpush.bf16.msra.mxu0 %v1016
        %1032 = vmatpush.bf16.msra.mxu0 %v1015
        %1033 = vmatpush.bf16.msra.mxu0 %v1014
        %1034 = vmatpush.bf16.msra.mxu0 %v1013
        %1035 = vmatpush.bf16.msra.mxu0 %v1012
        %1036 = vmatmul.bf16.gmra.mxu0 %v959
        %v1037 = vpop.f32.mrf.mxu0
        %v1038 = vadd.f32 %v978, %v1037
        %v1039 = vpop.f32.mrf.mxu0
        %1040 = vdwg.mxu0
        %vm1041 = vcmp.gt.f32.partialorder %v1038, 20.0
        %v1042 = vmin.f32 %v1038, 20.0
        %v1043 = vmul.f32 %v1042, 1.442695
        %v1044 = vpow.pop %v1043
        %v1045 = vadd.f32 %v1044, 1.0
        %v1046 = vlog2.pop %v1045
        %v1047 = vmul.f32 %v1046, 0.6931472
        %v1048 = vmul.f32 -0.5, %v1044
        %v1049 = vadd.f32 %v1048, 1.0
        %v1050 = vmul.f32 %v1049, %v1044
        %v1051 = vand.u32 2147483647, %v1044
        %vm1052 = vcmp.lt.f32.partialorder %v1051, 0.0004427343
        %v1053 = vsel %vm1052, %v1050, %v1047
        %v1054 = vsel %vm1041, %v1038, %v1053
        %v1055 = vld [vmem:[%s307] sm:$0xff]
        %v1056 = vadd.f32 %v1055, %v1054
        %vm1057 = vcmp.gt.f32.partialorder %v1056, 20.0
        %v1058 = vmin.f32 %v1056, 20.0
        %v1059 = vmul.f32 %v1058, 1.442695
        %v1060 = vpow.pop %v1059
        %v1061 = vadd.f32 %v1060, 1.0
        %v1062 = vlog2.pop %v1061
        %v1063 = vmul.f32 %v1062, 0.6931472
        %v1064 = vmul.f32 -0.5, %v1060
        %v1065 = vadd.f32 %v1064, 1.0
        %v1066 = vmul.f32 %v1065, %v1060
        %v1067 = vand.u32 2147483647, %v1060
        %vm1068 = vcmp.lt.f32.partialorder %v1067, 0.0004427343
        %v1069 = vsel %vm1068, %v1066, %v1063
        %v1070 = vsel %vm1057, %v1056, %v1069
        %1071 = vst [vmem:[%s302] sm:$0xff] %v1070
        %s1072 = sand.u32 %s168, 1
        %s1073 = scalar_lea.sflag [#allocation4], %s1072
        %s1074 = sand.u32 %s168, 1
        %s1075 = smul.addr %s1074, 8
        %s1076 = scalar_lea.vmem [#allocation7], %s1075
        // Predicated region
        $region53: #{inference_net_forward.1} parent=43 // pred_check
          %p1077 = pneg %p178
        $region54: #{inference_net_forward.1} parent=43 // pred_check_branch
          %1079 = sbr.rel (%p1077) target = $region56
        $region55: #{inference_net_forward.1} parent=43 // pred_region
          %1081 = vsyncadd %s1073, 0
          %s1082 = smul.addr %s24, 8
          %s1083 = scalar_lea.hbm %s6, %s1082
          %s1085 = sshll.u32 %s1076, 4
          %s1086 = int_to_ptr.vmem [resolvable:$true] %s1085
          %s1087 = sshll.u32 %s1083, 4
          %s1088 = int_to_ptr.hbm [resolvable:$true] %s1087
          %1090 = dma.vmem_to_hbm [thread:$0]  %s1086, 128, %s1088, %s1073
        $region56: #{inference_net_forward.1} parent=43 // pred_fallthru
          _
      $region44: #{inference_net_forward.1} parent=5 // pred_fallthru
        _
      %p1091 = scmp.le.s32.totalorder 2, %s19
      // Predicated region
      $region57: #{inference_net_forward.1} parent=5 // pred_check
        %p1092 = pneg %p1091
      $region58: #{inference_net_forward.1} parent=5 // pred_check_branch
        %1094 = sbr.rel (%p1092) target = $region60
      $region59: #{inference_net_forward.1} parent=5 // pred_region
        %s1095 = ssub.s32 %s19, 2
        // Predicated region
        $region61: #{inference_net_forward.1} parent=59 // pred_check
          %p1096 = pneg %p184
        $region62: #{inference_net_forward.1} parent=59 // pred_check_branch
          %1098 = sbr.rel (%p1096) target = $region64
        $region63: #{inference_net_forward.1} parent=59 // pred_region
          %s1099 = sand.u32 %s169, 1
          %s1100 = scalar_lea.sflag [#allocation4], %s1099
          %s1101 = sand.u32 %s169, 1
          %s1102 = smul.addr %s1101, 8
          %s1103 = scalar_lea.vmem [#allocation7], %s1102
          %1105 = dma.done %s1100, 128
        $region64: #{inference_net_forward.1} parent=59 // pred_fallthru
          _
      $region60: #{inference_net_forward.1} parent=5 // pred_fallthru
        _
    $region6: #{inference_net_forward.1} parent=1 // loop_footer
      %s23 = sadd.s32 1, %s19
    $region7: #{inference_net_forward.1} parent=1 // loop_footer_branch
      %18 = sbr.rel target = $region3
    $region8: #{inference_net_forward.1} parent=1 // loop_exit
      _
    %1106 = vsyncpa [#allocation3], 1
    %s1107 = scalar_lea.sflag [#allocation3], 1
    %1108 = vsyncpa %s1107, 1
    %1109 = vsyncpa [#allocation6], 1
    %1110 = vsyncpa [#allocation4], 1
    %s1111 = scalar_lea.sflag [#allocation4], 1
    %1112 = vsyncpa %s1111, 1

</llo_original>
